<compile_context>
chip_gen: v6e
topology: v6e:2x2x1
jax: 0.10.0
libtpu: 0.0.40
codegen_flags: <defaults>
</compile_context>

<pallas_src>
import jax
import jax.numpy as jnp
from jax.experimental import pallas as pl
from jax.experimental.pallas import tpu as pltpu

HIDDEN = 256
LANE = 128


def _round_up(n, m):
    return ((n + m - 1) // m) * m


def actor_kernel(x_ref, w1_ref, b1_ref, w2_ref, b2_ref, w3_ref, b3_ref, o_ref):
    # x tile arrives already in bf16; all matmuls accumulate in f32 on the MXU.
    h1 = jnp.dot(x_ref[...], w1_ref[...], preferred_element_type=jnp.float32)
    h1 = jnp.maximum(h1 + b1_ref[...], 0.0)                       # f32 epilogue
    h2 = jnp.dot(h1.astype(jnp.bfloat16), w2_ref[...],
                 preferred_element_type=jnp.float32)
    h2 = jnp.maximum(h2 + b2_ref[...], 0.0)
    mu = jnp.dot(h2.astype(jnp.bfloat16), w3_ref[...],
                 preferred_element_type=jnp.float32)
    o_ref[...] = jnp.tanh(mu + b3_ref[...])


def prepare_params(params):
    """One-time prep: transpose PyTorch (out,in) weights, zero-pad obs/action dims to a
    multiple of 128 lanes, cast weights to bf16; biases stay f32 as (1, out) rows."""
    obs = params["fc1_w"].shape[1]
    act = params["fc_mu_w"].shape[0]
    obs_p = _round_up(obs, LANE)
    act_p = _round_up(act, LANE)

    w1 = jnp.pad(params["fc1_w"].T, ((0, obs_p - obs), (0, 0))).astype(jnp.bfloat16)
    b1 = params["fc1_b"][None, :].astype(jnp.float32)
    w2 = params["fc2_w"].T.astype(jnp.bfloat16)
    b2 = params["fc2_b"][None, :].astype(jnp.float32)
    w3 = jnp.pad(params["fc_mu_w"].T, ((0, 0), (0, act_p - act))).astype(jnp.bfloat16)
    b3 = jnp.pad(params["fc_mu_b"], (0, act_p - act))[None, :].astype(jnp.float32)

    return {
        "w1": w1, "b1": b1, "w2": w2, "b2": b2, "w3": w3, "b3": b3,
        "obs": obs, "act": act, "obs_p": obs_p, "act_p": act_p,
    }


def actor_forward(x, prep, max_tile=1024):
    """x: (B, obs) f32. prep: output of prepare_params. Returns (B, action) f32."""
    B, obs = x.shape
    obs_p, act_p, act = prep["obs_p"], prep["act_p"], prep["act"]

    # Batch tile: large (amortize ~0.35us/step grid overhead) but never bigger than needed.
    tb = min(max_tile, _round_up(B, 8))
    b_pad = pl.cdiv(B, tb) * tb

    # Pad batch/obs and cast x to bf16 (halves the activation DMA bytes).
    x_p = jnp.zeros((b_pad, obs_p), jnp.bfloat16).at[:B, :obs].set(x.astype(jnp.bfloat16))

    resident = lambda shape: pl.BlockSpec(shape, lambda i: (0, 0))  # stays in VMEM across steps

    out = pl.pallas_call(
        actor_kernel,
        out_shape=jax.ShapeDtypeStruct((b_pad, act_p), jnp.float32),
        grid=(b_pad // tb,),
        in_specs=[
            pl.BlockSpec((tb, obs_p), lambda i: (i, 0)),   # x tile, pipelined over batch
            resident(prep["w1"].shape), resident(prep["b1"].shape),
            resident(prep["w2"].shape), resident(prep["b2"].shape),
            resident(prep["w3"].shape), resident(prep["b3"].shape),
        ],
        out_specs=pl.BlockSpec((tb, act_p), lambda i: (i, 0)),
        compiler_params=pltpu.CompilerParams(dimension_semantics=("parallel",)),
    )(x_p, prep["w1"], prep["b1"], prep["w2"], prep["b2"], prep["w3"], prep["b3"])

    return out[:B, :act]


def init_params(key, observation_size, action_size):
    """Deterministic init mimicking PyTorch's default Linear init (U(-1/sqrt(fan_in), +))."""
    ks = jax.random.split(key, 6)

    def lin(kw, kb, fan_in, fan_out):
        bound = 1.0 / jnp.sqrt(fan_in)
        w = jax.random.uniform(kw, (fan_out, fan_in), jnp.float32, -bound, bound)
        b = jax.random.uniform(kb, (fan_out,), jnp.float32, -bound, bound)
        return w, b

    fc1_w, fc1_b = lin(ks[0], ks[1], observation_size, HIDDEN)
    fc2_w, fc2_b = lin(ks[2], ks[3], HIDDEN, HIDDEN)
    fc_mu_w, fc_mu_b = lin(ks[4], ks[5], HIDDEN, action_size)
    return {
        "fc1_w": fc1_w, "fc1_b": fc1_b,
        "fc2_w": fc2_w, "fc2_b": fc2_b,
        "fc_mu_w": fc_mu_w, "fc_mu_b": fc_mu_b,
    }


def actor_ref(x, params):
    """Pure-JAX f32 reference identical to the PyTorch forward."""
    h1 = jax.nn.relu(x @ params["fc1_w"].T + params["fc1_b"])
    h2 = jax.nn.relu(h1 @ params["fc2_w"].T + params["fc2_b"])
    return jnp.tanh(h2 @ params["fc_mu_w"].T + params["fc_mu_b"])


if __name__ == "__main__":
    key = jax.random.PRNGKey(0)
    k_x, k_p = jax.random.split(key)

    batch = 8
    observation_size = 24   # e.g. Tennis env per-agent observation
    action_size = 2

    x = jax.random.normal(k_x, (batch, observation_size), jnp.float32)
    params = init_params(k_p, observation_size, action_size)

    prep = prepare_params(params)           # one-time: transpose / pad / bf16-cast
    out = actor_forward(x, prep)
    jax.block_until_ready(out)

    ref = actor_ref(x, params)
    assert out.shape == (batch, action_size)
    # bf16 matmuls with f32 accumulation: loosen tolerance vs the f32 reference.
    assert jnp.max(jnp.abs(out - ref)) < 5e-2

    print("KERNEL_OK")
</pallas_src>

<mosaic_0001>
module attributes {stable_mosaic.version = 11 : i64} {
  func.func @actor_kernel(%arg0: i32, %arg1: memref<8x128xbf16, #tpu.memory_space<vmem>>, %arg2: memref<128x256xbf16, #tpu.memory_space<vmem>>, %arg3: memref<1x256xf32, #tpu.memory_space<vmem>>, %arg4: memref<256x256xbf16, #tpu.memory_space<vmem>>, %arg5: memref<1x256xf32, #tpu.memory_space<vmem>>, %arg6: memref<256x128xbf16, #tpu.memory_space<vmem>>, %arg7: memref<1x128xf32, #tpu.memory_space<vmem>>, %arg8: memref<8x128xf32, #tpu.memory_space<vmem>>) attributes {dimension_semantics = [#tpu.dimension_semantics<parallel>], iteration_bounds = array<i64: 1>, scalar_prefetch = 0 : i64, scratch_operands = 0 : i64, tpu.core_type = #tpu.core_type<tc>, window_params = [{transform_indices = @transform_0, window_bounds = array<i64: 8, 128>}, {pipeline_mode = #tpu.pipeline_mode<synchronous>, transform_indices = @transform_1, window_bounds = array<i64: 128, 256>}, {pipeline_mode = #tpu.pipeline_mode<synchronous>, transform_indices = @transform_2, window_bounds = array<i64: 1, 256>}, {pipeline_mode = #tpu.pipeline_mode<synchronous>, transform_indices = @transform_3, window_bounds = array<i64: 256, 256>}, {pipeline_mode = #tpu.pipeline_mode<synchronous>, transform_indices = @transform_4, window_bounds = array<i64: 1, 256>}, {pipeline_mode = #tpu.pipeline_mode<synchronous>, transform_indices = @transform_5, window_bounds = array<i64: 256, 128>}, {pipeline_mode = #tpu.pipeline_mode<synchronous>, transform_indices = @transform_6, window_bounds = array<i64: 1, 128>}, {transform_indices = @transform_7, window_bounds = array<i64: 8, 128>}]} {
    %c0 = arith.constant 0 : index
    %c0_0 = arith.constant 0 : index
    %0 = vector.load %arg1[%c0, %c0_0] : memref<8x128xbf16, #tpu.memory_space<vmem>>, vector<8x128xbf16>
    %c0_1 = arith.constant 0 : index
    %c0_2 = arith.constant 0 : index
    %1 = vector.load %arg2[%c0_1, %c0_2] : memref<128x256xbf16, #tpu.memory_space<vmem>>, vector<128x256xbf16>
    %cst = arith.constant dense<0.000000e+00> : vector<8x256xf32>
    %2 = tpu.matmul %0, %1, %cst {dimension_numbers = #tpu.dot_dimension_numbers<[1], [0], [0], [1], [0, 0, 1, 1], [], []>} : vector<8x128xbf16>, vector<128x256xbf16>, vector<8x256xf32> -> vector<8x256xf32>
    %c0_3 = arith.constant 0 : index
    %c0_4 = arith.constant 0 : index
    %3 = vector.load %arg3[%c0_3, %c0_4] : memref<1x256xf32, #tpu.memory_space<vmem>>, vector<1x256xf32>
    %4 = vector.broadcast %3 : vector<1x256xf32> to vector<8x256xf32>
    %5 = arith.addf %2, %4 : vector<8x256xf32>
    %cst_5 = arith.constant 0.000000e+00 : f32
    %6 = vector.broadcast %cst_5 : f32 to vector<8x256xf32>
    %7 = arith.maximumf %5, %6 : vector<8x256xf32>
    %8 = arith.truncf %7 : vector<8x256xf32> to vector<8x256xbf16>
    %c0_6 = arith.constant 0 : index
    %c0_7 = arith.constant 0 : index
    %9 = vector.load %arg4[%c0_6, %c0_7] : memref<256x256xbf16, #tpu.memory_space<vmem>>, vector<256x256xbf16>
    %cst_8 = arith.constant dense<0.000000e+00> : vector<8x256xf32>
    %10 = tpu.matmul %8, %9, %cst_8 {dimension_numbers = #tpu.dot_dimension_numbers<[1], [0], [0], [1], [0, 0, 1, 1], [], []>} : vector<8x256xbf16>, vector<256x256xbf16>, vector<8x256xf32> -> vector<8x256xf32>
    %c0_9 = arith.constant 0 : index
    %c0_10 = arith.constant 0 : index
    %11 = vector.load %arg5[%c0_9, %c0_10] : memref<1x256xf32, #tpu.memory_space<vmem>>, vector<1x256xf32>
    %12 = vector.broadcast %11 : vector<1x256xf32> to vector<8x256xf32>
    %13 = arith.addf %10, %12 : vector<8x256xf32>
    %cst_11 = arith.constant 0.000000e+00 : f32
    %14 = vector.broadcast %cst_11 : f32 to vector<8x256xf32>
    %15 = arith.maximumf %13, %14 : vector<8x256xf32>
    %16 = arith.truncf %15 : vector<8x256xf32> to vector<8x256xbf16>
    %c0_12 = arith.constant 0 : index
    %c0_13 = arith.constant 0 : index
    %17 = vector.load %arg6[%c0_12, %c0_13] : memref<256x128xbf16, #tpu.memory_space<vmem>>, vector<256x128xbf16>
    %cst_14 = arith.constant dense<0.000000e+00> : vector<8x128xf32>
    %18 = tpu.matmul %16, %17, %cst_14 {dimension_numbers = #tpu.dot_dimension_numbers<[1], [0], [0], [1], [0, 0, 1, 1], [], []>} : vector<8x256xbf16>, vector<256x128xbf16>, vector<8x128xf32> -> vector<8x128xf32>
    %c0_15 = arith.constant 0 : index
    %c0_16 = arith.constant 0 : index
    %19 = vector.load %arg7[%c0_15, %c0_16] : memref<1x128xf32, #tpu.memory_space<vmem>>, vector<1x128xf32>
    %20 = vector.broadcast %19 : vector<1x128xf32> to vector<8x128xf32>
    %21 = arith.addf %18, %20 : vector<8x128xf32>
    %22 = math.tanh %21 : vector<8x128xf32>
    %c0_17 = arith.constant 0 : index
    %c0_18 = arith.constant 0 : index
    %23 = vector.load %arg8[%c0_17, %c0_18] : memref<8x128xf32, #tpu.memory_space<vmem>>, vector<8x128xf32>
    tpu.vector_store %arg8[%c0_17, %c0_18], %22 {strides = array<i32>} : memref<8x128xf32, #tpu.memory_space<vmem>>, vector<8x128xf32>,
    return
  }
  func.func @transform_0(%arg0: i32) -> (i32, i32) {
    %c0_i32 = arith.constant 0 : i32
    %c0_i32_0 = arith.constant 0 : i32
    return %arg0, %c0_i32 : i32, i32
  }
  func.func @transform_1(%arg0: i32) -> (i32, i32) {
    %c0_i32 = arith.constant 0 : i32
    %c0_i32_0 = arith.constant 0 : i32
    %c0_i32_1 = arith.constant 0 : i32
    return %c0_i32, %c0_i32_0 : i32, i32
  }
  func.func @transform_2(%arg0: i32) -> (i32, i32) {
    %c0_i32 = arith.constant 0 : i32
    %c0_i32_0 = arith.constant 0 : i32
    %c0_i32_1 = arith.constant 0 : i32
    return %c0_i32, %c0_i32_0 : i32, i32
  }
  func.func @transform_3(%arg0: i32) -> (i32, i32) {
    %c0_i32 = arith.constant 0 : i32
    %c0_i32_0 = arith.constant 0 : i32
    %c0_i32_1 = arith.constant 0 : i32
    return %c0_i32, %c0_i32_0 : i32, i32
  }
  func.func @transform_4(%arg0: i32) -> (i32, i32) {
    %c0_i32 = arith.constant 0 : i32
    %c0_i32_0 = arith.constant 0 : i32
    %c0_i32_1 = arith.constant 0 : i32
    return %c0_i32, %c0_i32_0 : i32, i32
  }
  func.func @transform_5(%arg0: i32) -> (i32, i32) {
    %c0_i32 = arith.constant 0 : i32
    %c0_i32_0 = arith.constant 0 : i32
    %c0_i32_1 = arith.constant 0 : i32
    return %c0_i32, %c0_i32_0 : i32, i32
  }
  func.func @transform_6(%arg0: i32) -> (i32, i32) {
    %c0_i32 = arith.constant 0 : i32
    %c0_i32_0 = arith.constant 0 : i32
    %c0_i32_1 = arith.constant 0 : i32
    return %c0_i32, %c0_i32_0 : i32, i32
  }
  func.func @transform_7(%arg0: i32) -> (i32, i32) {
    %c0_i32 = arith.constant 0 : i32
    %c0_i32_0 = arith.constant 0 : i32
    return %arg0, %c0_i32 : i32, i32
  }
}

</mosaic_0001>

<llo_original>
// kernel: tpu_custom_call.1
$region0: #{tpu_custom_call.1}
  #allocation0 [shape = 'u32[]', space=smem, size = 0x4, offset = 0x4, fixed_abs, tag = 'smem constant byte address 0x4 - core index']
  #allocation1 [shape = 'u32[144,128]{1,0:T(1,128)}', space=vmem, size = 0x12000, scoped, tag = 'internal scratch']
  %s0 = inlined_call_operand.hbm [shape: bf16[8,128], index: 0, kind: input, shape index: {}]
  %s1 = inlined_call_operand.hbm [shape: bf16[128,256], index: 1, kind: input, shape index: {}]
  %s2 = inlined_call_operand.vmem [shape: f32[1,256], index: 2, kind: input, shape index: {}]
  %s3 = inlined_call_operand.hbm [shape: bf16[256,256], index: 3, kind: input, shape index: {}]
  %s4 = inlined_call_operand.vmem [shape: f32[1,256], index: 4, kind: input, shape index: {}]
  %s5 = inlined_call_operand.hbm [shape: bf16[256,128], index: 5, kind: input, shape index: {}]
  %s6 = inlined_call_operand.vmem [shape: f32[1,128], index: 6, kind: input, shape index: {}]
  %s7 = inlined_call_operand.hbm [shape: f32[8,128], index: 7, kind: output, shape index: {}]
  %s8 = sld [smem:[#allocation0]]
  $region54: #{tpu_custom_call.1} parent=0
    _
  %s10 = ssub.s32 1, %s8
  %s11 = scalar_select 0, %s10, %s8
  $region1: #{tpu_custom_call.1} parent=0
    #allocation2 [shape = 'u8[2048]{0}', space=vmem, size = 0x800, scoped, tag = 'input window, operand 0, single buffered']
    #allocation3 [shape = 's32[1]{0}', space=sflag, size = 0x4, scoped, tag = 'scoped memory for tpu_custom_call.1']
    #allocation4 [shape = 's32[1]{0}', space=sflag, size = 0x4, scoped, tag = 'scoped memory for tpu_custom_call.1']
    #allocation5 [shape = 'u8[65536]{0}', space=vmem, size = 0x10000, scoped, tag = 'input window, operand 1, single buffered']
    #allocation6 [shape = 's32[1]{0}', space=sflag, size = 0x4, scoped, tag = 'scoped memory for tpu_custom_call.1']
    #allocation7 [shape = 'u8[131072]{0}', space=vmem, size = 0x20000, scoped, tag = 'input window, operand 3, single buffered']
    #allocation8 [shape = 'u8[65536]{0}', space=vmem, size = 0x10000, scoped, tag = 'input window, operand 5, single buffered']
    #allocation9 [shape = 's32[1]{0}', space=sflag, size = 0x4, scoped, tag = 'scoped memory for tpu_custom_call.1']
    #allocation10 [shape = 'u8[4096]{0}', space=vmem, size = 0x1000, scoped, tag = 'output window, operand 0, single buffered']
    %12 = vsyncpa [#allocation3], 0
    %13 = vsyncpa [#allocation6], 0
    %14 = vsyncpa [#allocation9], 0
    %15 = vsyncpa [#allocation4], 0
    // Predicated region
    $region2: #{tpu_custom_call.1} parent=1 // pred_check
      _
    $region3: #{tpu_custom_call.1} parent=1 // pred_check_branch
      %17 = sbr.rel (0) target = $region5
    $region4: #{tpu_custom_call.1} parent=1 // pred_region
      %s19 = ssub.s32 64, 64
      %20 = vsyncadd [#allocation3], %s19
      %s22 = sshll.u32 [#allocation2], 4
      %s23 = int_to_ptr.vmem [resolvable:$true] %s22
      %25 = dma.hbm_to_vmem [thread:$0]  %s0, 64, %s23, [#allocation3]
    $region5: #{tpu_custom_call.1} parent=1 // pred_fallthru
      _
    // Predicated region
    $region6: #{tpu_custom_call.1} parent=1 // pred_check
      _
    $region7: #{tpu_custom_call.1} parent=1 // pred_check_branch
      %27 = sbr.rel (0) target = $region9
    $region8: #{tpu_custom_call.1} parent=1 // pred_region
      %s29 = ssub.s32 2048, 2048
      %30 = vsyncadd [#allocation6], %s29
      %s31 = sshll.u32 [#allocation5], 4
      %s32 = int_to_ptr.vmem [resolvable:$true] %s31
      %37 = dma.hbm_to_vmem [thread:$0]  %s1, 2048, %s32, [#allocation6], 128, 128, 8
    $region9: #{tpu_custom_call.1} parent=1 // pred_fallthru
      _
    // Predicated region
    $region10: #{tpu_custom_call.1} parent=1 // pred_check
      _
    $region11: #{tpu_custom_call.1} parent=1 // pred_check_branch
      %39 = sbr.rel (0) target = $region13
    $region12: #{tpu_custom_call.1} parent=1 // pred_region
      _
    $region13: #{tpu_custom_call.1} parent=1 // pred_fallthru
      _
    // Predicated region
    $region14: #{tpu_custom_call.1} parent=1 // pred_check
      _
    $region15: #{tpu_custom_call.1} parent=1 // pred_check_branch
      %41 = sbr.rel (0) target = $region17
    $region16: #{tpu_custom_call.1} parent=1 // pred_region
      %s43 = ssub.s32 4096, 4096
      %44 = vsyncadd [#allocation6], %s43
      %s45 = sshll.u32 [#allocation7], 4
      %s46 = int_to_ptr.vmem [resolvable:$true] %s45
      %51 = dma.hbm_to_vmem [thread:$0]  %s3, 4096, %s46, [#allocation6], 128, 128, 8
    $region17: #{tpu_custom_call.1} parent=1 // pred_fallthru
      _
    // Predicated region
    $region18: #{tpu_custom_call.1} parent=1 // pred_check
      _
    $region19: #{tpu_custom_call.1} parent=1 // pred_check_branch
      %53 = sbr.rel (0) target = $region21
    $region20: #{tpu_custom_call.1} parent=1 // pred_region
      _
    $region21: #{tpu_custom_call.1} parent=1 // pred_fallthru
      _
    // Predicated region
    $region22: #{tpu_custom_call.1} parent=1 // pred_check
      _
    $region23: #{tpu_custom_call.1} parent=1 // pred_check_branch
      %55 = sbr.rel (0) target = $region25
    $region24: #{tpu_custom_call.1} parent=1 // pred_region
      %s57 = ssub.s32 2048, 2048
      %58 = vsyncadd [#allocation9], %s57
      %s59 = sshll.u32 [#allocation8], 4
      %s60 = int_to_ptr.vmem [resolvable:$true] %s59
      %65 = dma.hbm_to_vmem [thread:$0]  %s5, 2048, %s60, [#allocation9], 64, 64, 4
    $region25: #{tpu_custom_call.1} parent=1 // pred_fallthru
      _
    // Predicated region
    $region26: #{tpu_custom_call.1} parent=1 // pred_check
      _
    $region27: #{tpu_custom_call.1} parent=1 // pred_check_branch
      %67 = sbr.rel (0) target = $region29
    $region28: #{tpu_custom_call.1} parent=1 // pred_region
      _
    $region29: #{tpu_custom_call.1} parent=1 // pred_fallthru
      _
    // Predicated region
    $region30: #{tpu_custom_call.1} parent=1 // pred_check
      _
    $region31: #{tpu_custom_call.1} parent=1 // pred_check_branch
      %69 = sbr.rel (0) target = $region33
    $region32: #{tpu_custom_call.1} parent=1 // pred_region
      %70 = dma.done [#allocation3], 64
    $region33: #{tpu_custom_call.1} parent=1 // pred_fallthru
      _
    // Predicated region
    $region34: #{tpu_custom_call.1} parent=1 // pred_check
      _
    $region35: #{tpu_custom_call.1} parent=1 // pred_check_branch
      %72 = sbr.rel (0) target = $region37
    $region36: #{tpu_custom_call.1} parent=1 // pred_region
      %73 = dma.done [#allocation6], 2048
    $region37: #{tpu_custom_call.1} parent=1 // pred_fallthru
      _
    // Predicated region
    $region38: #{tpu_custom_call.1} parent=1 // pred_check
      _
    $region39: #{tpu_custom_call.1} parent=1 // pred_check_branch
      %75 = sbr.rel (0) target = $region41
    $region40: #{tpu_custom_call.1} parent=1 // pred_region
      %76 = dma.done [#allocation6], 4096
    $region41: #{tpu_custom_call.1} parent=1 // pred_fallthru
      _
    // Predicated region
    $region42: #{tpu_custom_call.1} parent=1 // pred_check
      _
    $region43: #{tpu_custom_call.1} parent=1 // pred_check_branch
      %78 = sbr.rel (0) target = $region45
    $region44: #{tpu_custom_call.1} parent=1 // pred_region
      %79 = dma.done [#allocation9], 2048
    $region45: #{tpu_custom_call.1} parent=1 // pred_fallthru
      _
    %v81 = vld [vmem:[#allocation2] sm:$0xf]
    %v82 = vld [vmem:[#allocation5] sm:$0xff]
    %v83 = vld [vmem:[#allocation5 + $0x8] sm:$0xff]
    %v84 = vld [vmem:[#allocation5 + $0x10] sm:$0xff]
    %v85 = vld [vmem:[#allocation5 + $0x18] sm:$0xff]
    %v86 = vld [vmem:[#allocation5 + $0x20] sm:$0xff]
    %v87 = vld [vmem:[#allocation5 + $0x28] sm:$0xff]
    %v88 = vld [vmem:[#allocation5 + $0x30] sm:$0xff]
    %v89 = vld [vmem:[#allocation5 + $0x38] sm:$0xff]
    %v90 = vld [vmem:[#allocation5 + $0x40] sm:$0xff]
    %v91 = vld [vmem:[#allocation5 + $0x48] sm:$0xff]
    %v92 = vld [vmem:[#allocation5 + $0x50] sm:$0xff]
    %v93 = vld [vmem:[#allocation5 + $0x58] sm:$0xff]
    %v94 = vld [vmem:[#allocation5 + $0x60] sm:$0xff]
    %v95 = vld [vmem:[#allocation5 + $0x68] sm:$0xff]
    %v96 = vld [vmem:[#allocation5 + $0x70] sm:$0xff]
    %v97 = vld [vmem:[#allocation5 + $0x78] sm:$0xff]
    %v98 = vld [vmem:[%s2] sm:$0x3]
    %v100 = vlaneseq
    %v101 = vshrl.u32 %v100, 7
    %v102 = vsub.s32 0, %v101
    %v103 = vrot.slane %v98, %v102
    %v104 = vlaneseq
    %v105 = vshrl.u32 %v104, 7
    %v106 = vsub.s32 1, %v105
    %v107 = vrot.slane %v98, %v106
    %v126 = vunpack.c.l.b16 %v82
    %v127 = vunpack.c.h.b16 %v82
    %v128 = vunpack.c.l.b16 %v83
    %v129 = vunpack.c.h.b16 %v83
    %v130 = vunpack.c.l.b16 %v84
    %v131 = vunpack.c.h.b16 %v84
    %v132 = vunpack.c.l.b16 %v85
    %v133 = vunpack.c.h.b16 %v85
    %v134 = vunpack.c.l.b16 %v86
    %v135 = vunpack.c.h.b16 %v86
    %v136 = vunpack.c.l.b16 %v87
    %v137 = vunpack.c.h.b16 %v87
    %v138 = vunpack.c.l.b16 %v88
    %v139 = vunpack.c.h.b16 %v88
    %v140 = vunpack.c.l.b16 %v89
    %v141 = vunpack.c.h.b16 %v89
    %v142 = vunpack.c.l.b16 %v90
    %v143 = vunpack.c.h.b16 %v90
    %v144 = vunpack.c.l.b16 %v91
    %v145 = vunpack.c.h.b16 %v91
    %v146 = vunpack.c.l.b16 %v92
    %v147 = vunpack.c.h.b16 %v92
    %v148 = vunpack.c.l.b16 %v93
    %v149 = vunpack.c.h.b16 %v93
    %v150 = vunpack.c.l.b16 %v94
    %v151 = vunpack.c.h.b16 %v94
    %v152 = vunpack.c.l.b16 %v95
    %v153 = vunpack.c.h.b16 %v95
    %v154 = vunpack.c.l.b16 %v96
    %v155 = vunpack.c.h.b16 %v96
    %v156 = vunpack.c.l.b16 %v97
    %v157 = vunpack.c.h.b16 %v97
    %v158 = vpack.c.b16 %v128, %v126
    %v159 = vpack.c.b16 %v129, %v127
    %v160 = vpack.c.b16 %v132, %v130
    %v161 = vpack.c.b16 %v133, %v131
    %v162 = vpack.c.b16 %v136, %v134
    %v163 = vpack.c.b16 %v137, %v135
    %v164 = vpack.c.b16 %v140, %v138
    %v165 = vpack.c.b16 %v141, %v139
    %v166 = vpack.c.b16 %v144, %v142
    %v167 = vpack.c.b16 %v145, %v143
    %v168 = vpack.c.b16 %v148, %v146
    %v169 = vpack.c.b16 %v149, %v147
    %v170 = vpack.c.b16 %v152, %v150
    %v171 = vpack.c.b16 %v153, %v151
    %v172 = vpack.c.b16 %v156, %v154
    %v173 = vpack.c.b16 %v157, %v155
    %190 = vmatprep.subr.bf16.mxu0 %v173
    %191 = vmatpush1.bf16.msra.mxu0 %v172
    %192 = vmatprep.subr.bf16.mxu0 %v171
    %193 = vmatpush1.bf16.msra.mxu0 %v170
    %194 = vmatprep.subr.bf16.mxu0 %v169
    %195 = vmatpush1.bf16.msra.mxu0 %v168
    %196 = vmatprep.subr.bf16.mxu0 %v167
    %197 = vmatpush1.bf16.msra.mxu0 %v166
    %198 = vmatprep.subr.bf16.mxu0 %v165
    %199 = vmatpush1.bf16.msra.mxu0 %v164
    %200 = vmatprep.subr.bf16.mxu0 %v163
    %201 = vmatpush1.bf16.msra.mxu0 %v162
    %202 = vmatprep.subr.bf16.mxu0 %v161
    %203 = vmatpush1.bf16.msra.mxu0 %v160
    %204 = vmatprep.subr.bf16.mxu0 %v159
    %205 = vmatpush1.bf16.msra.mxu0 %v158
    %206 = vmatprep.subr.bf16.mxu0 0
    %207 = vmatpush2.bf16.msra.mxu0 0
    %208 = vmatprep.subr.bf16.mxu0 0
    %209 = vmatpush2.bf16.msra.mxu0 0
    %210 = vmatprep.subr.bf16.mxu0 0
    %211 = vmatpush2.bf16.msra.mxu0 0
    %212 = vmatprep.subr.bf16.mxu0 0
    %213 = vmatpush2.bf16.msra.mxu0 0
    %214 = vmatprep.subr.bf16.mxu0 0
    %215 = vmatpush2.bf16.msra.mxu0 0
    %216 = vmatprep.subr.bf16.mxu0 0
    %217 = vmatpush2.bf16.msra.mxu0 0
    %218 = vmatprep.subr.bf16.mxu0 0
    %219 = vmatpush2.bf16.msra.mxu0 0
    %220 = vmatprep.subr.bf16.mxu0 0
    %221 = vmatpush2.bf16.msra.mxu0 0
    %222 = vmatprep.mubr.bf16.mxu0 0
    %223 = vmatmul.mubr.bf16.gmra.mxu0 %v81
    %v224 = vpop.f32.mrf.mxu0
    %v225 = vadd.f32 %v103, %v224
    %v226 = vpop.f32.mrf.mxu0
    %v227 = vadd.f32 %v107, %v226
    %v228 = vpop.f32.mrf.mxu0
    %v229 = vpop.f32.mrf.mxu0
    %230 = vdwg.mxu0
    %v231 = vmax.f32 %v225, 0.0
    %v232 = vmax.f32 %v227, 0.0
    %v233 = vpack.c.bf16 %v231, %v231
    %v234 = vpack.c.bf16 %v232, %v232
    %v235 = vld [vmem:[#allocation7] sm:$0xff]
    %v236 = vld [vmem:[#allocation7 + $0x8] sm:$0xff]
    %v237 = vld [vmem:[#allocation7 + $0x10] sm:$0xff]
    %v238 = vld [vmem:[#allocation7 + $0x18] sm:$0xff]
    %v239 = vld [vmem:[#allocation7 + $0x20] sm:$0xff]
    %v240 = vld [vmem:[#allocation7 + $0x28] sm:$0xff]
    %v241 = vld [vmem:[#allocation7 + $0x30] sm:$0xff]
    %v242 = vld [vmem:[#allocation7 + $0x38] sm:$0xff]
    %v243 = vld [vmem:[#allocation7 + $0x40] sm:$0xff]
    %v244 = vld [vmem:[#allocation7 + $0x48] sm:$0xff]
    %v245 = vld [vmem:[#allocation7 + $0x50] sm:$0xff]
    %v246 = vld [vmem:[#allocation7 + $0x58] sm:$0xff]
    %v247 = vld [vmem:[#allocation7 + $0x60] sm:$0xff]
    %v248 = vld [vmem:[#allocation7 + $0x68] sm:$0xff]
    %v249 = vld [vmem:[#allocation7 + $0x70] sm:$0xff]
    %v250 = vld [vmem:[#allocation7 + $0x78] sm:$0xff]
    %v251 = vld [vmem:[#allocation7 + $0x80] sm:$0xff]
    %v252 = vld [vmem:[#allocation7 + $0x88] sm:$0xff]
    %v253 = vld [vmem:[#allocation7 + $0x90] sm:$0xff]
    %v254 = vld [vmem:[#allocation7 + $0x98] sm:$0xff]
    %v255 = vld [vmem:[#allocation7 + $0xa0] sm:$0xff]
    %v256 = vld [vmem:[#allocation7 + $0xa8] sm:$0xff]
    %v257 = vld [vmem:[#allocation7 + $0xb0] sm:$0xff]
    %v258 = vld [vmem:[#allocation7 + $0xb8] sm:$0xff]
    %v259 = vld [vmem:[#allocation7 + $0xc0] sm:$0xff]
    %v260 = vld [vmem:[#allocation7 + $0xc8] sm:$0xff]
    %v261 = vld [vmem:[#allocation7 + $0xd0] sm:$0xff]
    %v262 = vld [vmem:[#allocation7 + $0xd8] sm:$0xff]
    %v263 = vld [vmem:[#allocation7 + $0xe0] sm:$0xff]
    %v264 = vld [vmem:[#allocation7 + $0xe8] sm:$0xff]
    %v265 = vld [vmem:[#allocation7 + $0xf0] sm:$0xff]
    %v266 = vld [vmem:[#allocation7 + $0xf8] sm:$0xff]
    %v267 = vld [vmem:[%s4] sm:$0x3]
    %v269 = vlaneseq
    %v270 = vshrl.u32 %v269, 7
    %v271 = vsub.s32 0, %v270
    %v272 = vrot.slane %v267, %v271
    %v273 = vlaneseq
    %v274 = vshrl.u32 %v273, 7
    %v275 = vsub.s32 1, %v274
    %v276 = vrot.slane %v267, %v275
    %v311 = vunpack.c.l.b16 %v235
    %v312 = vunpack.c.h.b16 %v235
    %v313 = vunpack.c.l.b16 %v236
    %v314 = vunpack.c.h.b16 %v236
    %v315 = vunpack.c.l.b16 %v237
    %v316 = vunpack.c.h.b16 %v237
    %v317 = vunpack.c.l.b16 %v238
    %v318 = vunpack.c.h.b16 %v238
    %v319 = vunpack.c.l.b16 %v239
    %v320 = vunpack.c.h.b16 %v239
    %v321 = vunpack.c.l.b16 %v240
    %v322 = vunpack.c.h.b16 %v240
    %v323 = vunpack.c.l.b16 %v241
    %v324 = vunpack.c.h.b16 %v241
    %v325 = vunpack.c.l.b16 %v242
    %v326 = vunpack.c.h.b16 %v242
    %v327 = vunpack.c.l.b16 %v243
    %v328 = vunpack.c.h.b16 %v243
    %v329 = vunpack.c.l.b16 %v244
    %v330 = vunpack.c.h.b16 %v244
    %v331 = vunpack.c.l.b16 %v245
    %v332 = vunpack.c.h.b16 %v245
    %v333 = vunpack.c.l.b16 %v246
    %v334 = vunpack.c.h.b16 %v246
    %v335 = vunpack.c.l.b16 %v247
    %v336 = vunpack.c.h.b16 %v247
    %v337 = vunpack.c.l.b16 %v248
    %v338 = vunpack.c.h.b16 %v248
    %v339 = vunpack.c.l.b16 %v249
    %v340 = vunpack.c.h.b16 %v249
    %v341 = vunpack.c.l.b16 %v250
    %v342 = vunpack.c.h.b16 %v250
    %v343 = vunpack.c.l.b16 %v251
    %v344 = vunpack.c.h.b16 %v251
    %v345 = vunpack.c.l.b16 %v252
    %v346 = vunpack.c.h.b16 %v252
    %v347 = vunpack.c.l.b16 %v253
    %v348 = vunpack.c.h.b16 %v253
    %v349 = vunpack.c.l.b16 %v254
    %v350 = vunpack.c.h.b16 %v254
    %v351 = vunpack.c.l.b16 %v255
    %v352 = vunpack.c.h.b16 %v255
    %v353 = vunpack.c.l.b16 %v256
    %v354 = vunpack.c.h.b16 %v256
    %v355 = vunpack.c.l.b16 %v257
    %v356 = vunpack.c.h.b16 %v257
    %v357 = vunpack.c.l.b16 %v258
    %v358 = vunpack.c.h.b16 %v258
    %v359 = vunpack.c.l.b16 %v259
    %v360 = vunpack.c.h.b16 %v259
    %v361 = vunpack.c.l.b16 %v260
    %v362 = vunpack.c.h.b16 %v260
    %v363 = vunpack.c.l.b16 %v261
    %v364 = vunpack.c.h.b16 %v261
    %v365 = vunpack.c.l.b16 %v262
    %v366 = vunpack.c.h.b16 %v262
    %v367 = vunpack.c.l.b16 %v263
    %v368 = vunpack.c.h.b16 %v263
    %v369 = vunpack.c.l.b16 %v264
    %v370 = vunpack.c.h.b16 %v264
    %v371 = vunpack.c.l.b16 %v265
    %v372 = vunpack.c.h.b16 %v265
    %v373 = vunpack.c.l.b16 %v266
    %v374 = vunpack.c.h.b16 %v266
    %v375 = vpack.c.b16 %v313, %v311
    %v376 = vpack.c.b16 %v314, %v312
    %v377 = vpack.c.b16 %v317, %v315
    %v378 = vpack.c.b16 %v318, %v316
    %v379 = vpack.c.b16 %v321, %v319
    %v380 = vpack.c.b16 %v322, %v320
    %v381 = vpack.c.b16 %v325, %v323
    %v382 = vpack.c.b16 %v326, %v324
    %v383 = vpack.c.b16 %v329, %v327
    %v384 = vpack.c.b16 %v330, %v328
    %v385 = vpack.c.b16 %v333, %v331
    %v386 = vpack.c.b16 %v334, %v332
    %v387 = vpack.c.b16 %v337, %v335
    %v388 = vpack.c.b16 %v338, %v336
    %v389 = vpack.c.b16 %v341, %v339
    %v390 = vpack.c.b16 %v342, %v340
    %v391 = vpack.c.b16 %v345, %v343
    %v392 = vpack.c.b16 %v346, %v344
    %v393 = vpack.c.b16 %v349, %v347
    %v394 = vpack.c.b16 %v350, %v348
    %v395 = vpack.c.b16 %v353, %v351
    %v396 = vpack.c.b16 %v354, %v352
    %v397 = vpack.c.b16 %v357, %v355
    %v398 = vpack.c.b16 %v358, %v356
    %v399 = vpack.c.b16 %v361, %v359
    %v400 = vpack.c.b16 %v362, %v360
    %v401 = vpack.c.b16 %v365, %v363
    %v402 = vpack.c.b16 %v366, %v364
    %v403 = vpack.c.b16 %v369, %v367
    %v404 = vpack.c.b16 %v370, %v368
    %v405 = vpack.c.b16 %v373, %v371
    %v406 = vpack.c.b16 %v374, %v372
    %439 = vmatprep.subr.bf16.mxu0 %v390
    %440 = vmatpush1.bf16.msra.mxu0 %v389
    %441 = vmatprep.subr.bf16.mxu0 %v388
    %442 = vmatpush1.bf16.msra.mxu0 %v387
    %443 = vmatprep.subr.bf16.mxu0 %v386
    %444 = vmatpush1.bf16.msra.mxu0 %v385
    %445 = vmatprep.subr.bf16.mxu0 %v384
    %446 = vmatpush1.bf16.msra.mxu0 %v383
    %447 = vmatprep.subr.bf16.mxu0 %v382
    %448 = vmatpush1.bf16.msra.mxu0 %v381
    %449 = vmatprep.subr.bf16.mxu0 %v380
    %450 = vmatpush1.bf16.msra.mxu0 %v379
    %451 = vmatprep.subr.bf16.mxu0 %v378
    %452 = vmatpush1.bf16.msra.mxu0 %v377
    %453 = vmatprep.subr.bf16.mxu0 %v376
    %454 = vmatpush1.bf16.msra.mxu0 %v375
    %455 = vmatprep.subr.bf16.mxu0 %v406
    %456 = vmatpush2.bf16.msra.mxu0 %v405
    %457 = vmatprep.subr.bf16.mxu0 %v404
    %458 = vmatpush2.bf16.msra.mxu0 %v403
    %459 = vmatprep.subr.bf16.mxu0 %v402
    %460 = vmatpush2.bf16.msra.mxu0 %v401
    %461 = vmatprep.subr.bf16.mxu0 %v400
    %462 = vmatpush2.bf16.msra.mxu0 %v399
    %463 = vmatprep.subr.bf16.mxu0 %v398
    %464 = vmatpush2.bf16.msra.mxu0 %v397
    %465 = vmatprep.subr.bf16.mxu0 %v396
    %466 = vmatpush2.bf16.msra.mxu0 %v395
    %467 = vmatprep.subr.bf16.mxu0 %v394
    %468 = vmatpush2.bf16.msra.mxu0 %v393
    %469 = vmatprep.subr.bf16.mxu0 %v392
    %470 = vmatpush2.bf16.msra.mxu0 %v391
    %471 = vmatprep.mubr.bf16.mxu0 %v234
    %472 = vmatmul.mubr.bf16.gmra.mxu0 %v233
    %v473 = vpop.f32.mrf.mxu0
    %v474 = vadd.f32 %v272, %v473
    %v475 = vpop.f32.mrf.mxu0
    %v476 = vadd.f32 %v276, %v475
    %v477 = vpop.f32.mrf.mxu0
    %v478 = vpop.f32.mrf.mxu0
    %479 = vdwg.mxu0
    %v480 = vmax.f32 %v474, 0.0
    %v481 = vmax.f32 %v476, 0.0
    %v482 = vpack.c.bf16 %v480, %v480
    %v483 = vpack.c.bf16 %v481, %v481
    %v484 = vld [vmem:[#allocation8] sm:$0xf]
    %v485 = vld [vmem:[#allocation8 + $0x4] sm:$0xf]
    %v486 = vld [vmem:[#allocation8 + $0x8] sm:$0xf]
    %v487 = vld [vmem:[#allocation8 + $0xc] sm:$0xf]
    %v488 = vld [vmem:[#allocation8 + $0x10] sm:$0xf]
    %v489 = vld [vmem:[#allocation8 + $0x14] sm:$0xf]
    %v490 = vld [vmem:[#allocation8 + $0x18] sm:$0xf]
    %v491 = vld [vmem:[#allocation8 + $0x1c] sm:$0xf]
    %v492 = vld [vmem:[#allocation8 + $0x20] sm:$0xf]
    %v493 = vld [vmem:[#allocation8 + $0x24] sm:$0xf]
    %v494 = vld [vmem:[#allocation8 + $0x28] sm:$0xf]
    %v495 = vld [vmem:[#allocation8 + $0x2c] sm:$0xf]
    %v496 = vld [vmem:[#allocation8 + $0x30] sm:$0xf]
    %v497 = vld [vmem:[#allocation8 + $0x34] sm:$0xf]
    %v498 = vld [vmem:[#allocation8 + $0x38] sm:$0xf]
    %v499 = vld [vmem:[#allocation8 + $0x3c] sm:$0xf]
    %v500 = vld [vmem:[#allocation8 + $0x40] sm:$0xf]
    %v501 = vld [vmem:[#allocation8 + $0x44] sm:$0xf]
    %v502 = vld [vmem:[#allocation8 + $0x48] sm:$0xf]
    %v503 = vld [vmem:[#allocation8 + $0x4c] sm:$0xf]
    %v504 = vld [vmem:[#allocation8 + $0x50] sm:$0xf]
    %v505 = vld [vmem:[#allocation8 + $0x54] sm:$0xf]
    %v506 = vld [vmem:[#allocation8 + $0x58] sm:$0xf]
    %v507 = vld [vmem:[#allocation8 + $0x5c] sm:$0xf]
    %v508 = vld [vmem:[#allocation8 + $0x60] sm:$0xf]
    %v509 = vld [vmem:[#allocation8 + $0x64] sm:$0xf]
    %v510 = vld [vmem:[#allocation8 + $0x68] sm:$0xf]
    %v511 = vld [vmem:[#allocation8 + $0x6c] sm:$0xf]
    %v512 = vld [vmem:[#allocation8 + $0x70] sm:$0xf]
    %v513 = vld [vmem:[#allocation8 + $0x74] sm:$0xf]
    %v514 = vld [vmem:[#allocation8 + $0x78] sm:$0xf]
    %v515 = vld [vmem:[#allocation8 + $0x7c] sm:$0xf]
    %v516 = vld [vmem:[%s6] sm:$0x1]
    %v518 = vlaneseq
    %v519 = vshrl.u32 %v518, 7
    %v520 = vsub.s32 0, %v519
    %v521 = vrot.slane %v516, %v520
    %v555 = vunpack.c.l.b16 %v484
    %v556 = vunpack.c.l.b16 %v485
    %v557 = vunpack.c.l.b16 %v486
    %v558 = vunpack.c.l.b16 %v487
    %v559 = vunpack.c.l.b16 %v488
    %v560 = vunpack.c.l.b16 %v489
    %v561 = vunpack.c.l.b16 %v490
    %v562 = vunpack.c.l.b16 %v491
    %v563 = vunpack.c.l.b16 %v492
    %v564 = vunpack.c.l.b16 %v493
    %v565 = vunpack.c.l.b16 %v494
    %v566 = vunpack.c.l.b16 %v495
    %v567 = vunpack.c.l.b16 %v496
    %v568 = vunpack.c.l.b16 %v497
    %v569 = vunpack.c.l.b16 %v498
    %v570 = vunpack.c.l.b16 %v499
    %v571 = vunpack.c.l.b16 %v500
    %v572 = vunpack.c.l.b16 %v501
    %v573 = vunpack.c.l.b16 %v502
    %v574 = vunpack.c.l.b16 %v503
    %v575 = vunpack.c.l.b16 %v504
    %v576 = vunpack.c.l.b16 %v505
    %v577 = vunpack.c.l.b16 %v506
    %v578 = vunpack.c.l.b16 %v507
    %v579 = vunpack.c.l.b16 %v508
    %v580 = vunpack.c.l.b16 %v509
    %v581 = vunpack.c.l.b16 %v510
    %v582 = vunpack.c.l.b16 %v511
    %v583 = vunpack.c.l.b16 %v512
    %v584 = vunpack.c.l.b16 %v513
    %v585 = vunpack.c.l.b16 %v514
    %v586 = vunpack.c.l.b16 %v515
    %v587 = vpack.c.b16 %v556, %v555
    %v588 = vpack.c.b16 %v558, %v557
    %v589 = vpack.c.b16 %v560, %v559
    %v590 = vpack.c.b16 %v562, %v561
    %v591 = vpack.c.b16 %v564, %v563
    %v592 = vpack.c.b16 %v566, %v565
    %v593 = vpack.c.b16 %v568, %v567
    %v594 = vpack.c.b16 %v570, %v569
    %v595 = vpack.c.b16 %v572, %v571
    %v596 = vpack.c.b16 %v574, %v573
    %v597 = vpack.c.b16 %v576, %v575
    %v598 = vpack.c.b16 %v578, %v577
    %v599 = vpack.c.b16 %v580, %v579
    %v600 = vpack.c.b16 %v582, %v581
    %v601 = vpack.c.b16 %v584, %v583
    %v602 = vpack.c.b16 %v586, %v585
    %619 = vmatprep.subr.bf16.mxu0 0
    %620 = vmatpush1.bf16.msra.mxu0 %v594
    %621 = vmatprep.subr.bf16.mxu0 0
    %622 = vmatpush1.bf16.msra.mxu0 %v593
    %623 = vmatprep.subr.bf16.mxu0 0
    %624 = vmatpush1.bf16.msra.mxu0 %v592
    %625 = vmatprep.subr.bf16.mxu0 0
    %626 = vmatpush1.bf16.msra.mxu0 %v591
    %627 = vmatprep.subr.bf16.mxu0 0
    %628 = vmatpush1.bf16.msra.mxu0 %v590
    %629 = vmatprep.subr.bf16.mxu0 0
    %630 = vmatpush1.bf16.msra.mxu0 %v589
    %631 = vmatprep.subr.bf16.mxu0 0
    %632 = vmatpush1.bf16.msra.mxu0 %v588
    %633 = vmatprep.subr.bf16.mxu0 0
    %634 = vmatpush1.bf16.msra.mxu0 %v587
    %635 = vmatprep.subr.bf16.mxu0 0
    %636 = vmatpush2.bf16.msra.mxu0 %v602
    %637 = vmatprep.subr.bf16.mxu0 0
    %638 = vmatpush2.bf16.msra.mxu0 %v601
    %639 = vmatprep.subr.bf16.mxu0 0
    %640 = vmatpush2.bf16.msra.mxu0 %v600
    %641 = vmatprep.subr.bf16.mxu0 0
    %642 = vmatpush2.bf16.msra.mxu0 %v599
    %643 = vmatprep.subr.bf16.mxu0 0
    %644 = vmatpush2.bf16.msra.mxu0 %v598
    %645 = vmatprep.subr.bf16.mxu0 0
    %646 = vmatpush2.bf16.msra.mxu0 %v597
    %647 = vmatprep.subr.bf16.mxu0 0
    %648 = vmatpush2.bf16.msra.mxu0 %v596
    %649 = vmatprep.subr.bf16.mxu0 0
    %650 = vmatpush2.bf16.msra.mxu0 %v595
    %651 = vmatprep.mubr.bf16.mxu0 %v483
    %652 = vmatmul.mubr.bf16.gmra.mxu0 %v482
    %v653 = vpop.f32.mrf.mxu0
    %v654 = vadd.f32 %v521, %v653
    %v655 = vpop.f32.mrf.mxu0
    %v656 = vpop.f32.mrf.mxu0
    %v657 = vpop.f32.mrf.mxu0
    %658 = vdwg.mxu0
    %v659 = vtanh.pop %v654
    %660 = vst [vmem:[#allocation10] sm:$0xff] %v659
    // Predicated region
    $region46: #{tpu_custom_call.1} parent=1 // pred_check
      _
    $region47: #{tpu_custom_call.1} parent=1 // pred_check_branch
      %662 = sbr.rel (0) target = $region49
    $region48: #{tpu_custom_call.1} parent=1 // pred_region
      %s664 = ssub.s32 128, 128
      %665 = vsyncadd [#allocation4], %s664
      %s667 = sshll.u32 [#allocation10], 4
      %s668 = int_to_ptr.vmem [resolvable:$true] %s667
      %670 = dma.vmem_to_hbm [thread:$0]  %s668, 128, %s7, [#allocation4]
    $region49: #{tpu_custom_call.1} parent=1 // pred_fallthru
      _
    // Predicated region
    $region50: #{tpu_custom_call.1} parent=1 // pred_check
      _
    $region51: #{tpu_custom_call.1} parent=1 // pred_check_branch
      %672 = sbr.rel (0) target = $region53
    $region52: #{tpu_custom_call.1} parent=1 // pred_region
      %673 = dma.done [#allocation4], 128
    $region53: #{tpu_custom_call.1} parent=1 // pred_fallthru
      _
    %674 = vsyncpa [#allocation3], 1
    %675 = vsyncpa [#allocation6], 1
    %676 = vsyncpa [#allocation9], 1
    %677 = vsyncpa [#allocation4], 1

</llo_original>
